<compile_context>
chip_gen: v7x
topology: tpu7x:2x2x1
jax: 0.10.0
libtpu: 0.0.40
codegen_flags: <defaults>
</compile_context>

<pallas_src>
import functools

import jax
import jax.numpy as jnp
from jax.experimental import pallas as pl
from jax.experimental.pallas import tpu as pltpu


_NEG_LOG_MIN_P = 6.907755278982137  # -log(0.001)


def _loss_kernel(x_ref, t_ref, out_ref, *, batch_size, tile_b, tile_c):
    i = pl.program_id(0)          # batch-tile index
    j = pl.program_id(1)          # class-tile index

    x = x_ref[...].astype(jnp.float32)                       # (tile_b, tile_c)
    t = t_ref[...]                                            # (tile_b, 1) int32

    # Class id of each lane, offset by this class tile's base.
    cls = jax.lax.broadcasted_iota(jnp.int32, x.shape, 1) + j * tile_c
    p_mask = cls == t

    # Exact identity (one exp + one log per element):
    #   positives: -log(max(sigmoid(x), 0.001))     == min(softplus(-x), -log(0.001))
    #   negatives: -log(1 - min(sigmoid(x), 0.999)) == min(softplus(+x), -log(0.001))
    z = jnp.where(p_mask, -x, x)
    sp = jnp.maximum(z, 0.0) + jnp.log1p(jnp.exp(-jnp.abs(z)))
    term = jnp.minimum(sp, _NEG_LOG_MIN_P)

    # Mask padded rows of a partial last batch tile (static no-op if B % tile_b == 0).
    if batch_size % tile_b != 0:
        rows_left = batch_size - i * tile_b
        row = jax.lax.broadcasted_iota(jnp.int32, x.shape, 0)
        term = jnp.where(row < rows_left, term, 0.0)

    zeros = jnp.zeros_like(term)
    pos = jnp.sum(jnp.where(p_mask, term, zeros), axis=0, keepdims=True)  # (1, tile_c)
    tot = jnp.sum(term, axis=0, keepdims=True)                            # (1, tile_c)
    neg = tot - pos                                                       # saves a select

    both = jnp.concatenate([pos, neg], axis=0)                            # (2, tile_c)
    out_ref[...] = both[None, :, :]                                       # (1, 2, tile_c)


def _pick_tile_c(C):
    """Lane-dense class tile: a multiple-of-128 divisor of C (<= 512), else C."""
    if C % 128 != 0 or C <= 512:
        return C
    for cand in (512, 384, 256, 128):
        if C % cand == 0:
            return cand
    return C


def _pick_tile_b(B, tile_c):
    """Batch tile: ~1 MiB of f32 per tile (<= 512 rows), and at least 2 grid
    steps for B >= 16 (>= 4 for B >= 64) so the auto-pipeline overlaps DMA
    with compute and v7x can shard across both TensorCores."""
    cap = (1 << 20) // (tile_c * 4)
    cap = max(8, min(512, (cap // 8) * 8))
    if B < 16 and B <= cap:
        return B                     # tiny batch: single step is fine
    if B >= 64:
        frac = max(8, ((B // 4) // 8) * 8)
    else:
        frac = max(8, ((B // 2) // 8) * 8)
    return min(cap, frac)


def _vmem_limit_bytes():
    try:
        cap = pltpu.get_tpu_info().vmem_capacity_bytes
        return int(min(cap // 2, 64 * 1024 * 1024))
    except Exception:
        return 32 * 1024 * 1024      # safe default on all generations


def multi_logistic_loss(x, target, *, gamma=0.5, top_k=0):
    """x: (B, C) float32/bfloat16 logits, target: (B,) int class ids.

    Matches Loss.forward for top_k == 0.  (For C == 1 the reference divides by
    zero; here the negative term uses max(C-1, 1) and is an empty sum anyway.)
    """
    if top_k:
        # TODO(synk): top_k > 0 branch (torch.topk over negatives) not implemented.
        raise NotImplementedError("top_k > 0 not supported")

    B, C = x.shape
    tile_c = _pick_tile_c(C)
    tile_b = _pick_tile_b(B, tile_c)
    nb = pl.cdiv(B, tile_b)
    nc = C // tile_c
    t2 = target.reshape(B, 1).astype(jnp.int32)

    kernel = functools.partial(
        _loss_kernel, batch_size=B, tile_b=tile_b, tile_c=tile_c)

    parts = pl.pallas_call(
        kernel,
        out_shape=jax.ShapeDtypeStruct((nb, 2, C), jnp.float32),
        grid_spec=pltpu.PrefetchScalarGridSpec(
            num_scalar_prefetch=0,
            grid=(nb, nc),
            in_specs=[
                pl.BlockSpec((tile_b, tile_c), lambda i, j: (i, j)),
                pl.BlockSpec((tile_b, 1), lambda i, j: (i, 0)),
            ],
            out_specs=pl.BlockSpec((1, 2, tile_c), lambda i, j: (i, 0, j)),
        ),
        compiler_params=pltpu.CompilerParams(
            dimension_semantics=("parallel", "parallel"),
            vmem_limit_bytes=_vmem_limit_bytes(),
        ),
    )(x, t2)

    # Tiny final reduction (keeps both grid axes parallel, no accumulator).
    pos_loss = jnp.sum(parts[:, 0, :]) / jnp.float32(B)
    neg_loss = jnp.sum(parts[:, 1, :]) / jnp.float32(B * max(C - 1, 1))
    return pos_loss * jnp.float32(gamma) + neg_loss * jnp.float32(1.0 - gamma)


def _reference_loss(x, target, gamma=0.5):
    B, C = x.shape
    sig = jax.nn.sigmoid(x.astype(jnp.float32))
    idx = jnp.arange(C)[None, :]
    p_mask = idx == target.reshape(-1, 1)
    pos = -jnp.log(jnp.maximum(sig, 0.001))
    neg = -jnp.log(1.0 - jnp.minimum(sig, 0.999))
    pos_loss = jnp.sum(jnp.where(p_mask, pos, 0.0)) / B
    neg_loss = jnp.sum(jnp.where(p_mask, 0.0, neg)) / (B * (C - 1))
    return pos_loss * gamma + neg_loss * (1.0 - gamma)


if __name__ == "__main__":
    key = jax.random.PRNGKey(0)

    # Main check: batch=16, num_classes=128 (small shapes consistent with the module).
    B, C = 16, 128
    kx, kt, kx2, kt2 = jax.random.split(key, 4)
    x = jax.random.normal(kx, (B, C), dtype=jnp.float32)
    target = jax.random.randint(kt, (B,), 0, C, dtype=jnp.int32)
    loss = multi_logistic_loss(x, target, gamma=0.5)
    jax.block_until_ready(loss)
    ref = _reference_loss(x, target, gamma=0.5)
    assert jnp.allclose(loss, ref, rtol=1e-4, atol=1e-5), (loss, ref)

    # Secondary check: bf16 logits + batch not a multiple of the tile (partial-tile mask).
    B2, C2 = 20, 128
    x2 = jax.random.normal(kx2, (B2, C2), dtype=jnp.float32)
    target2 = jax.random.randint(kt2, (B2,), 0, C2, dtype=jnp.int32)
    loss2 = multi_logistic_loss(x2.astype(jnp.bfloat16), target2, gamma=0.5)
    jax.block_until_ready(loss2)
    ref2 = _reference_loss(x2.astype(jnp.bfloat16), target2, gamma=0.5)
    assert jnp.allclose(loss2, ref2, rtol=2e-3, atol=2e-3), (loss2, ref2)

    print("KERNEL_OK")
</pallas_src>

<mosaic_0001>
module attributes {stable_mosaic.version = 11 : i64} {
  func.func @_loss_kernel(%arg0: i32, %arg1: i32, %arg2: memref<8x128xf32, #tpu.memory_space<vmem>>, %arg3: memref<8x1xi32, #tpu.memory_space<vmem>>, %arg4: memref<1x2x128xf32, #tpu.memory_space<vmem>>) attributes {dimension_semantics = [#tpu.dimension_semantics<parallel>, #tpu.dimension_semantics<parallel>], iteration_bounds = array<i64: 2, 1>, scalar_prefetch = 0 : i64, scratch_operands = 0 : i64, tpu.core_type = #tpu.core_type<tc>, window_params = [{transform_indices = @transform_0, window_bounds = array<i64: 8, 128>}, {transform_indices = @transform_1, window_bounds = array<i64: 8, 1>}, {transform_indices = @transform_2, window_bounds = array<i64: 1, 2, 128>}]} {
    %c0 = arith.constant 0 : index
    %c0_0 = arith.constant 0 : index
    %0 = vector.load %arg2[%c0, %c0_0] : memref<8x128xf32, #tpu.memory_space<vmem>>, vector<8x128xf32>
    %c0_1 = arith.constant 0 : index
    %c0_2 = arith.constant 0 : index
    %1 = vector.load %arg3[%c0_1, %c0_2] : memref<8x1xi32, #tpu.memory_space<vmem>>, vector<8x1xi32>
    %2 = tpu.iota {dimensions = array<i32: 1>} : vector<8x128xi32>
    %c128_i32 = arith.constant 128 : i32
    %3 = arith.muli %arg1, %c128_i32 : i32
    %4 = vector.broadcast %3 : i32 to vector<8x128xi32>
    %5 = arith.addi %2, %4 : vector<8x128xi32>
    %6 = vector.broadcast %1 : vector<8x1xi32> to vector<8x128xi32>
    %7 = arith.cmpi eq, %5, %6 : vector<8x128xi32>
    %cst = arith.constant 0.000000e+00 : f32
    %8 = vector.broadcast %cst : f32 to vector<8x128xf32>
    %9 = arith.subf %8, %0 : vector<8x128xf32>
    %10 = arith.select %7, %9, %0 : vector<8x128xi1>, vector<8x128xf32>
    %cst_3 = arith.constant 0.000000e+00 : f32
    %11 = vector.broadcast %cst_3 : f32 to vector<8x128xf32>
    %12 = arith.maximumf %10, %11 : vector<8x128xf32>
    %13 = math.absf %10 : vector<8x128xf32>
    %cst_4 = arith.constant 0.000000e+00 : f32
    %14 = vector.broadcast %cst_4 : f32 to vector<8x128xf32>
    %15 = arith.subf %14, %13 : vector<8x128xf32>
    %16 = math.exp %15 : vector<8x128xf32>
    %17 = math.log1p %16 : vector<8x128xf32>
    %18 = arith.addf %12, %17 : vector<8x128xf32>
    %cst_5 = arith.constant 6.90775537 : f32
    %19 = vector.broadcast %cst_5 : f32 to vector<8x128xf32>
    %20 = arith.minimumf %18, %19 : vector<8x128xf32>
    %cst_6 = arith.constant 0.000000e+00 : f32
    %21 = vector.broadcast %cst_6 : f32 to vector<8x128xf32>
    %22 = arith.select %7, %20, %21 : vector<8x128xi1>, vector<8x128xf32>
    %cst_7 = arith.constant dense<0.000000e+00> : vector<128xf32>
    %23 = vector.multi_reduction <add>, %22, %cst_7 [0] : vector<8x128xf32> to vector<128xf32>
    %24 = vector.shape_cast %23 : vector<128xf32> to vector<1x128xf32>
    %cst_8 = arith.constant dense<0.000000e+00> : vector<128xf32>
    %25 = vector.multi_reduction <add>, %20, %cst_8 [0] : vector<8x128xf32> to vector<128xf32>
    %26 = vector.shape_cast %25 : vector<128xf32> to vector<1x128xf32>
    %27 = arith.subf %26, %24 : vector<1x128xf32>
    %28 = tpu.concatenate %24, %27 in 0 : vector<1x128xf32>, vector<1x128xf32> -> vector<2x128xf32>
    %29 = vector.shape_cast %28 : vector<2x128xf32> to vector<1x2x128xf32>
    %c0_9 = arith.constant 0 : index
    %c0_10 = arith.constant 0 : index
    %c0_11 = arith.constant 0 : index
    %30 = vector.load %arg4[%c0_9, %c0_10, %c0_11] : memref<1x2x128xf32, #tpu.memory_space<vmem>>, vector<1x2x128xf32>
    tpu.vector_store %arg4[%c0_9, %c0_10, %c0_11], %29 {strides = array<i32>} : memref<1x2x128xf32, #tpu.memory_space<vmem>>, vector<1x2x128xf32>,
    return
  }
  func.func @transform_0(%arg0: i32, %arg1: i32) -> (i32, i32) {
    %c0_i32 = arith.constant 0 : i32
    return %arg0, %arg1 : i32, i32
  }
  func.func @transform_1(%arg0: i32, %arg1: i32) -> (i32, i32) {
    %c0_i32 = arith.constant 0 : i32
    %c0_i32_0 = arith.constant 0 : i32
    return %arg0, %c0_i32 : i32, i32
  }
  func.func @transform_2(%arg0: i32, %arg1: i32) -> (i32, i32, i32) {
    %c0_i32 = arith.constant 0 : i32
    %c0_i32_0 = arith.constant 0 : i32
    return %arg0, %c0_i32, %arg1 : i32, i32, i32
  }
}

</mosaic_0001>

<llo_original>
// kernel: tpu_custom_call.1
$region0: #{tpu_custom_call.1}
  #allocation0 [shape = 'u32[]', space=smem, size = 0x4, offset = 0x4, fixed_abs, tag = 'smem constant byte address 0x4 - core index']
  #allocation1 [shape = 'u32[144,128]{1,0:T(1,128)}', space=vmem, size = 0x12000, scoped, tag = 'internal scratch']
  %s0 = inlined_call_operand.vmem [shape: f32[16,128], index: 0, kind: input, shape index: {}]
  %s1 = inlined_call_operand.vmem [shape: s32[16,1], index: 1, kind: input, shape index: {}]
  %s2 = inlined_call_operand.hbm [shape: f32[2,2,128], index: 2, kind: output, shape index: {}]
  %s3 = sld [smem:[#allocation0]]
  $region41: #{tpu_custom_call.1} parent=0
    _
  %s5 = ssub.s32 1, %s3
  %s6 = scalar_select 0, %s5, %s3
  $region1: #{tpu_custom_call.1} parent=0
    #allocation2 [shape = 'u8[2048]{0}', space=vmem, size = 0x800, scoped, tag = 'output window, operand 0']
    #allocation3 [shape = 's32[2]{0}', space=sflag, size = 0x8, scoped, tag = 'scoped memory for tpu_custom_call.1']
    %7 = vsyncpa [#allocation3], 0
    %s8 = scalar_lea.sflag [#allocation3], 1
    %9 = vsyncpa %s8, 0
    loop: start=0, step=1, limit=4
    $region2: #{tpu_custom_call.1} parent=1 // loop_pre_header
      _
    $region3: #{tpu_custom_call.1} parent=1 // loop_header
      %s11 = sphi 0, %s15
      %p12 = scmp.ge.s32.totalorder %s11, 4
      %s18 = sphi 0, %s30
      %s19 = sphi 0, %s26
      %s20 = sphi 0, %s18
      %s21 = sphi 0, %s19
      %s22 = sphi 0, %s20
      %s23 = sphi 0, %s21
      %s35 = sphi 0, %s37
      %s38 = sphi 0, %s35
      %s39 = sphi 0, %s38
      %s55 = sphi 0, %s39
      %s61 = sphi 0, %s63
      %s64 = sphi 0, %s61
      %s65 = sphi 0, %s64
      %s81 = sphi 0, %s65
      %s89 = sphi 0, %s91
      %s92 = sphi 0, %s89
      %s93 = sphi 0, %s92
      %s109 = sphi 0, %s93
    $region4: #{tpu_custom_call.1} parent=1 // loop_header_branch
      %14 = sbr.rel (%p12) target = $region8
    $region5: #{tpu_custom_call.1} parent=1 // loop_body
      %s16 = ssub.s32 %s11, 1
      %s17 = ssub.s32 %s11, 2
      %s24 = sadd.s32 1, %s19
      %p25 = scmp.ge.s32.totalorder %s24, 1
      %s26 = scalar_select %p25, 0, %s24
      %s27 = sadd.s32 1, %s18
      %s28 = scalar_select %p25, %s27, %s18
      %p29 = scmp.ge.s32.totalorder %s28, 2
      %s30 = scalar_select %p29, 0, %s28
      %s31 = ssub.s32 %s18, %s30
      %s32 = ssub.s32 %s19, %s26
      %s33 = sor.u32 %s31, %s32
      %p34 = scmp.eq.s32.totalorder %s33, 0
      %s36 = sadd.s32 %s35, 1
      %s37 = scalar_select %p34, %s35, %s36
      %p40 = pneg %p34
      %p41 = scmp.eq.s32.totalorder %s11, 1
      %p42 = por %p40, %p41
      %p43 = scmp.ne.s32.totalorder %s35, %s38
      %p44 = scmp.eq.s32.totalorder %s11, 0
      %p45 = por %p43, %p44
      %p46 = scmp.ne.s32.totalorder %s35, %s38
      %p47 = scmp.eq.s32.totalorder %s16, 1
      %p48 = por %p46, %p47
      %p49 = scmp.ne.s32.totalorder %s38, %s39
      %p50 = scmp.eq.s32.totalorder %s16, 0
      %p51 = por %p49, %p50
      %p52 = scmp.ne.s32.totalorder %s38, %s39
      %p53 = scmp.eq.s32.totalorder %s17, 1
      %p54 = por %p52, %p53
      %p56 = scmp.ne.s32.totalorder %s39, %s55
      %p57 = scmp.eq.s32.totalorder %s17, 0
      %p58 = por %p56, %p57
      %s59 = ssub.s32 %s18, %s30
      %p60 = scmp.eq.s32.totalorder %s59, 0
      %s62 = sadd.s32 %s61, 1
      %s63 = scalar_select %p60, %s61, %s62
      %p66 = pneg %p60
      %p67 = scmp.eq.s32.totalorder %s11, 1
      %p68 = por %p66, %p67
      %p69 = scmp.ne.s32.totalorder %s61, %s64
      %p70 = scmp.eq.s32.totalorder %s11, 0
      %p71 = por %p69, %p70
      %p72 = scmp.ne.s32.totalorder %s61, %s64
      %p73 = scmp.eq.s32.totalorder %s16, 1
      %p74 = por %p72, %p73
      %p75 = scmp.ne.s32.totalorder %s64, %s65
      %p76 = scmp.eq.s32.totalorder %s16, 0
      %p77 = por %p75, %p76
      %p78 = scmp.ne.s32.totalorder %s64, %s65
      %p79 = scmp.eq.s32.totalorder %s17, 1
      %p80 = por %p78, %p79
      %p82 = scmp.ne.s32.totalorder %s65, %s81
      %p83 = scmp.eq.s32.totalorder %s17, 0
      %p84 = por %p82, %p83
      %s85 = ssub.s32 %s18, %s30
      %s86 = ssub.s32 %s19, %s26
      %s87 = sor.u32 %s85, %s86
      %p88 = scmp.eq.s32.totalorder %s87, 0
      %s90 = sadd.s32 %s89, 1
      %s91 = scalar_select %p88, %s89, %s90
      %p94 = pneg %p88
      %p95 = scmp.eq.s32.totalorder %s11, 1
      %p96 = por %p94, %p95
      %p97 = scmp.ne.s32.totalorder %s89, %s92
      %p98 = scmp.eq.s32.totalorder %s11, 0
      %p99 = por %p97, %p98
      %p100 = scmp.ne.s32.totalorder %s89, %s92
      %p101 = scmp.eq.s32.totalorder %s16, 1
      %p102 = por %p100, %p101
      %p103 = scmp.ne.s32.totalorder %s92, %s93
      %p104 = scmp.eq.s32.totalorder %s16, 0
      %p105 = por %p103, %p104
      %p106 = scmp.ne.s32.totalorder %s92, %s93
      %p107 = scmp.eq.s32.totalorder %s17, 1
      %p108 = por %p106, %p107
      %p110 = scmp.ne.s32.totalorder %s93, %s109
      %p111 = scmp.eq.s32.totalorder %s17, 0
      %p112 = por %p110, %p111
      %p113 = scmp.le.s32.totalorder 1, %s11
      %p114 = scmp.lt.s32.totalorder %s11, 3
      %p115 = pnand %p113, %p114
      %p116 = pneg %p115
      // Predicated region
      $region9: #{tpu_custom_call.1} parent=5 // pred_check
        _
      $region10: #{tpu_custom_call.1} parent=5 // pred_check_branch
        %118 = sbr.rel (%p115) target = $region12
      $region11: #{tpu_custom_call.1} parent=5 // pred_region
        %s119 = ssub.s32 %s11, 1
      $region12: #{tpu_custom_call.1} parent=5 // pred_fallthru
        _
      %p120 = scmp.lt.s32.totalorder %s11, 2
      // Predicated region
      $region13: #{tpu_custom_call.1} parent=5 // pred_check
        %p121 = pneg %p120
      $region14: #{tpu_custom_call.1} parent=5 // pred_check_branch
        %123 = sbr.rel (%p121) target = $region16
      $region15: #{tpu_custom_call.1} parent=5 // pred_region
        // Predicated region
        $region17: #{tpu_custom_call.1} parent=15 // pred_check
          %p124 = pneg %p45
        $region18: #{tpu_custom_call.1} parent=15 // pred_check_branch
          %126 = sbr.rel (%p124) target = $region20
        $region19: #{tpu_custom_call.1} parent=15 // pred_region
          %p127 = scmp.lt.s32.totalorder %s18, 1
          %s128 = scalar_select %p127, %s18, 1
          %p129 = scmp.lt.s32.totalorder %s19, 0
          %s130 = scalar_select %p129, %s19, 0
          %s131 = sadd.s32 %s130, %s128
          %s132 = smul.addr %s131, 8
          %s133 = scalar_lea.vmem %s0, %s132
        $region20: #{tpu_custom_call.1} parent=15 // pred_fallthru
          _
        // Predicated region
        $region21: #{tpu_custom_call.1} parent=15 // pred_check
          %p134 = pneg %p71
        $region22: #{tpu_custom_call.1} parent=15 // pred_check_branch
          %136 = sbr.rel (%p134) target = $region24
        $region23: #{tpu_custom_call.1} parent=15 // pred_region
          %p137 = scmp.lt.s32.totalorder %s18, 1
          %s138 = scalar_select %p137, %s18, 1
          %s139 = smul.addr %s138, 8
          %s140 = scalar_lea.vmem %s1, %s139
        $region24: #{tpu_custom_call.1} parent=15 // pred_fallthru
          _
      $region16: #{tpu_custom_call.1} parent=5 // pred_fallthru
        _
      %p141 = scmp.le.s32.totalorder 1, %s11
      %p142 = scmp.lt.s32.totalorder %s11, 3
      %p143 = pnand %p141, %p142
      %p144 = pneg %p143
      // Predicated region
      $region25: #{tpu_custom_call.1} parent=5 // pred_check
        _
      $region26: #{tpu_custom_call.1} parent=5 // pred_check_branch
        %146 = sbr.rel (%p143) target = $region28
      $region27: #{tpu_custom_call.1} parent=5 // pred_region
        %s147 = ssub.s32 %s11, 1
        %p148 = scmp.lt.s32.totalorder %s20, 1
        %s149 = scalar_select %p148, %s20, 1
        %p150 = scmp.lt.s32.totalorder %s21, 0
        %s151 = scalar_select %p150, %s21, 0
        %s152 = sadd.s32 %s151, %s149
        %s153 = smul.addr %s152, 8
        %s154 = scalar_lea.vmem %s0, %s153
        %p155 = pneg %p51
        %p156 = pneg %p48
        %p157 = scmp.lt.s32.totalorder %s20, 1
        %s158 = scalar_select %p157, %s20, 1
        %s159 = smul.addr %s158, 8
        %s160 = scalar_lea.vmem %s1, %s159
        %p161 = pneg %p77
        %p162 = pneg %p74
        %p163 = pneg %p105
        %p164 = pneg %p102
        %s165 = sand.u32 %s92, 1
        %s166 = scalar_lea.sflag [#allocation3], %s165
        %s167 = sand.u32 %s92, 1
        %s168 = smul.addr %s167, 2
        %s169 = scalar_lea.vmem [#allocation2], %s168
        %p170 = scmp.lt.s32.totalorder %s20, 1
        %s171 = scalar_select %p170, %s20, 1
        %p172 = scmp.lt.s32.totalorder %s21, 0
        %s173 = scalar_select %p172, %s21, 0
        %s174 = sadd.s32 %s173, %s171
        %s175 = smul.addr %s174, 8
        %s176 = scalar_lea.vmem %s0, %s175
        %p177 = scmp.lt.s32.totalorder %s20, 1
        %s178 = scalar_select %p177, %s20, 1
        %s179 = smul.addr %s178, 8
        %s180 = scalar_lea.vmem %s1, %s179
        %v181 = vld [vmem:[%s176] sm:$0xff]
        %v182 = vld [vmem:[%s180] sm:$0xff]
        %v183 = vlaneseq
        %v184 = vand.u32 %v183, 127
        %s185 = smul.u32 %s21, 128
        %v186 = vstv %s185
        %v187 = vadd.s32 %v184, %v186
        %188 = vset.pattern.permute.xlu0 0
        %189 = vperm.xlu0 %188, %v182
        %v190 = vpop.permute.xlu0 %189
        %vm191 = vcmp.eq.s32.totalorder %v187, %v190
        %v192 = vsub.f32 0.0, %v181
        %v193 = vsel %vm191, %v192, %v181
        %v194 = vmax.f32 %v193, 0.0
        %v195 = vand.u32 2147483647, %v193
        %v196 = vsub.f32 0.0, %v195
        %v197 = vmul.f32 %v196, 1.442695
        %v198 = vpow.pop %v197
        %v199 = vadd.f32 %v198, 1.0
        %v200 = vlog2.pop %v199
        %v201 = vmul.f32 %v200, 0.6931472
        %v202 = vmul.f32 -0.5, %v198
        %v203 = vadd.f32 %v202, 1.0
        %v204 = vmul.f32 %v203, %v198
        %v205 = vand.u32 2147483647, %v198
        %vm206 = vcmp.lt.f32.partialorder %v205, 0.0004427343
        %v207 = vsel %vm206, %v204, %v201
        %v208 = vadd.f32 %v194, %v207
        %v209 = vmin.f32 %v208, 6.9077554
        %v210 = vsel %vm191, %v209, 0.0
        %v211 = vrot.slane %v210, 4
        %v212 = vadd.f32 %v210, %v211
        %v213 = vrot.slane %v212, 2
        %v214 = vadd.f32 %v212, %v213
        %v215 = vrot.slane %v214, 1
        %v216 = vadd.f32 %v214, %v215
        %v217 = vrot.slane %v209, 4
        %v218 = vadd.f32 %v209, %v217
        %v219 = vrot.slane %v218, 2
        %v220 = vadd.f32 %v218, %v219
        %v221 = vrot.slane %v220, 1
        %v222 = vadd.f32 %v220, %v221
        %v223 = vsub.f32 %v222, %v216
        %vm224 = vcmask 1040384
        %v225 = vsel %vm224, %v216, %v223
        %226 = vst [vmem:[%s169] sm:$0x3] %v225
        %s227 = sand.u32 %s92, 1
        %s228 = scalar_lea.sflag [#allocation3], %s227
        %s229 = sand.u32 %s92, 1
        %s230 = smul.addr %s229, 2
        %s231 = scalar_lea.vmem [#allocation2], %s230
        // Predicated region
        $region29: #{tpu_custom_call.1} parent=27 // pred_check
          %p232 = pneg %p102
        $region30: #{tpu_custom_call.1} parent=27 // pred_check_branch
          %234 = sbr.rel (%p232) target = $region32
        $region31: #{tpu_custom_call.1} parent=27 // pred_region
          %s236 = ssub.s32 32, 32
          %237 = vsyncadd %s228, %s236
          %s238 = sadd.s32 %s21, %s20
          %s239 = smul.addr %s238, 32
          %s240 = scalar_lea.hbm %s2, %s239
          %s242 = sshll.u32 %s231, 4
          %s243 = int_to_ptr.vmem [resolvable:$true] %s242
          %245 = dma.vmem_to_hbm [thread:$0]  %s243, 32, %s240, %s228
        $region32: #{tpu_custom_call.1} parent=27 // pred_fallthru
          _
      $region28: #{tpu_custom_call.1} parent=5 // pred_fallthru
        _
      %p246 = scmp.le.s32.totalorder 2, %s11
      // Predicated region
      $region33: #{tpu_custom_call.1} parent=5 // pred_check
        %p247 = pneg %p246
      $region34: #{tpu_custom_call.1} parent=5 // pred_check_branch
        %249 = sbr.rel (%p247) target = $region36
      $region35: #{tpu_custom_call.1} parent=5 // pred_region
        %s250 = ssub.s32 %s11, 2
        // Predicated region
        $region37: #{tpu_custom_call.1} parent=35 // pred_check
          %p251 = pneg %p108
        $region38: #{tpu_custom_call.1} parent=35 // pred_check_branch
          %253 = sbr.rel (%p251) target = $region40
        $region39: #{tpu_custom_call.1} parent=35 // pred_region
          %s254 = sand.u32 %s93, 1
          %s255 = scalar_lea.sflag [#allocation3], %s254
          %s256 = sand.u32 %s93, 1
          %s257 = smul.addr %s256, 2
          %s258 = scalar_lea.vmem [#allocation2], %s257
          %259 = dma.done %s255, 32
        $region40: #{tpu_custom_call.1} parent=35 // pred_fallthru
          _
      $region36: #{tpu_custom_call.1} parent=5 // pred_fallthru
        _
    $region6: #{tpu_custom_call.1} parent=1 // loop_footer
      %s15 = sadd.s32 1, %s11
    $region7: #{tpu_custom_call.1} parent=1 // loop_footer_branch
      %10 = sbr.rel target = $region3
    $region8: #{tpu_custom_call.1} parent=1 // loop_exit
      _
    %260 = vsyncpa [#allocation3], 1
    %s261 = scalar_lea.sflag [#allocation3], 1
    %262 = vsyncpa %s261, 1

</llo_original>
